<compile_context>
chip_gen: v6e
topology: v6e:2x2x1
jax: 0.10.0
libtpu: 0.0.40
codegen_flags: <defaults>
</compile_context>

<pallas_src>
import functools

import jax
import jax.numpy as jnp
from jax import lax
from jax.experimental import pallas as pl
from jax.experimental.pallas import tpu as pltpu


def _round_up(v, m):
    return (v + m - 1) // m * m


def _round_down(v, m):
    return (v // m) * m


def _var_dim02_kernel(x_ref, o_ref, mean_acc, m2_acc, *, n_true, tn):
    """Streaming per-channel variance; grid = (channel_blocks, reduce_blocks)."""
    ni = pl.program_id(1)

    @pl.when(ni == 0)
    def _init():
        mean_acc[...] = jnp.zeros_like(mean_acc)
        m2_acc[...] = jnp.zeros_like(m2_acc)

    x = x_ref[...].astype(jnp.float32)  # (CB, TN)
    cb = x.shape[0]

    # Valid-element bookkeeping (only the last reduce tile can be partial).
    n_a_i = jnp.minimum(ni * tn, n_true)          # elements folded in so far
    n_b_i = jnp.minimum(n_true - ni * tn, tn)     # valid elements in this tile
    n_a = n_a_i.astype(jnp.float32)
    n_b = n_b_i.astype(jnp.float32)
    n_ab = n_a + n_b

    lane = lax.broadcasted_iota(jnp.int32, (cb, tn), 1)
    mask = lane < n_b_i

    # Per-tile two-pass (mean, M2), padded lanes excluded.
    xm = jnp.where(mask, x, 0.0)
    mean_b = jnp.sum(xm, axis=1, keepdims=True) / n_b      # (CB, 1)
    dev = jnp.where(mask, x - mean_b, 0.0)
    m2_b = jnp.sum(dev * dev, axis=1, keepdims=True)        # (CB, 1)

    # Chan's pairwise combine with the running (count, mean, M2).
    mean_a = mean_acc[...]
    m2_a = m2_acc[...]
    delta = mean_b - mean_a
    mean_acc[...] = mean_a + delta * (n_b / n_ab)
    m2_acc[...] = m2_a + m2_b + delta * delta * (n_a * n_b / n_ab)

    @pl.when(ni == pl.num_programs(1) - 1)
    def _finalize():
        # Unbiased variance (correction=1), torch.ops.aten.var default.
        o_ref[...] = (m2_acc[...] / (n_true - 1)).astype(o_ref.dtype)


def var_dim02_keepdim(x, *, target_tile_bytes=2 * 1024 * 1024):
    """Equivalent of torch.ops.aten.var(x, dim=(0, 2), keepdim=True), rank-3 f32."""
    assert x.ndim == 3, "module is annotated for rank-3 input"
    d0, d1, d2 = x.shape
    c = d1
    n = d0 * d2

    # Layout plumbing: each channel's reduced elements on one lane-dense row.
    x2 = jnp.transpose(x, (1, 0, 2)).reshape(c, n)

    # Channel (sublane) tiling: multiple of 8, capped; C padded to a multiple
    # of the channel block so the grid divides exactly.
    cb = min(_round_up(c, 8), 256)
    c_pad = _round_up(c, cb)

    # Reduce (lane) tiling: multiple of 128, sized so a double-buffered input
    # tile stays well under the scoped VMEM limit on v5e/v6e/v7x.
    tn = max(128, _round_down(target_tile_bytes // (cb * 4), 128))
    tn = min(tn, _round_up(n, 128))
    n_pad = _round_up(n, tn)

    x2p = jnp.pad(x2, ((0, c_pad - c), (0, n_pad - n)))

    kernel = functools.partial(_var_dim02_kernel, n_true=n, tn=tn)
    out = pl.pallas_call(
        kernel,
        out_shape=jax.ShapeDtypeStruct((c_pad, 1), jnp.float32),
        grid=(c_pad // cb, n_pad // tn),
        in_specs=[pl.BlockSpec((cb, tn), lambda ci, ni: (ci, ni))],
        out_specs=pl.BlockSpec((cb, 1), lambda ci, ni: (ci, 0)),
        scratch_shapes=[
            pltpu.VMEM((cb, 1), jnp.float32),  # running mean per channel
            pltpu.VMEM((cb, 1), jnp.float32),  # running M2 per channel
        ],
        compiler_params=pltpu.CompilerParams(
            dimension_semantics=("parallel", "arbitrary"),
        ),
    )(x2p)

    # Drop channel padding, restore keepdim shape (1, D1, 1).
    return out[:c, :].reshape(1, c, 1)


if __name__ == "__main__":
    key = jax.random.PRNGKey(0)
    x = jax.random.normal(key, (2, 4, 16), dtype=jnp.float32)

    out = var_dim02_keepdim(x)
    out = jax.block_until_ready(out)

    ref = jnp.var(x, axis=(0, 2), ddof=1, keepdims=True)
    assert out.shape == (1, 4, 1), out.shape
    assert jnp.allclose(out, ref, rtol=1e-5, atol=1e-6), (out, ref)

    print("KERNEL_OK")
</pallas_src>

<mosaic_0001>
module attributes {stable_mosaic.version = 11 : i64} {
  func.func @_var_dim02_kernel(%arg0: i32, %arg1: i32, %arg2: memref<8x128xf32, #tpu.memory_space<vmem>>, %arg3: memref<8x1xf32, #tpu.memory_space<vmem>>, %arg4: memref<8x1xf32, #tpu.memory_space<vmem>>, %arg5: memref<8x1xf32, #tpu.memory_space<vmem>>) attributes {dimension_semantics = [#tpu.dimension_semantics<parallel>, #tpu.dimension_semantics<arbitrary>], iteration_bounds = array<i64: 1, 1>, scalar_prefetch = 0 : i64, scratch_operands = 2 : i64, tpu.core_type = #tpu.core_type<tc>, window_params = [{transform_indices = @transform_0, window_bounds = array<i64: 8, 128>}, {transform_indices = @transform_1, window_bounds = array<i64: 8, 1>}]} {
    %c0_i32 = arith.constant 0 : i32
    %0 = arith.cmpi eq, %arg1, %c0_i32 : i32
    %1 = arith.extui %0 : i1 to i32
    %c0_i32_0 = arith.constant 0 : i32
    %2 = arith.cmpi ne, %1, %c0_i32_0 : i32
    scf.if %2 {
      %cst_18 = arith.constant 0.000000e+00 : f32
      %47 = vector.broadcast %cst_18 : f32 to vector<8x1xf32>
      %c0_19 = arith.constant 0 : index
      %c0_20 = arith.constant 0 : index
      %48 = vector.load %arg4[%c0_19, %c0_20] : memref<8x1xf32, #tpu.memory_space<vmem>>, vector<8x1xf32>
      tpu.vector_store %arg4[%c0_19, %c0_20], %47 {strides = array<i32>} : memref<8x1xf32, #tpu.memory_space<vmem>>, vector<8x1xf32>,
      %cst_21 = arith.constant 0.000000e+00 : f32
      %49 = vector.broadcast %cst_21 : f32 to vector<8x1xf32>
      %c0_22 = arith.constant 0 : index
      %c0_23 = arith.constant 0 : index
      %50 = vector.load %arg5[%c0_22, %c0_23] : memref<8x1xf32, #tpu.memory_space<vmem>>, vector<8x1xf32>
      tpu.vector_store %arg5[%c0_22, %c0_23], %49 {strides = array<i32>} : memref<8x1xf32, #tpu.memory_space<vmem>>, vector<8x1xf32>,
    } else {
    }
    %c0 = arith.constant 0 : index
    %c0_1 = arith.constant 0 : index
    %3 = vector.load %arg2[%c0, %c0_1] : memref<8x128xf32, #tpu.memory_space<vmem>>, vector<8x128xf32>
    %c128_i32 = arith.constant 128 : i32
    %4 = arith.muli %arg1, %c128_i32 : i32
    %c32_i32 = arith.constant 32 : i32
    %5 = arith.minsi %4, %c32_i32 : i32
    %c128_i32_2 = arith.constant 128 : i32
    %6 = arith.muli %arg1, %c128_i32_2 : i32
    %c32_i32_3 = arith.constant 32 : i32
    %7 = arith.subi %c32_i32_3, %6 : i32
    %c128_i32_4 = arith.constant 128 : i32
    %8 = arith.minsi %7, %c128_i32_4 : i32
    %9 = arith.sitofp %5 : i32 to f32
    %10 = arith.sitofp %8 : i32 to f32
    %11 = arith.addf %9, %10 : f32
    %12 = tpu.iota {dimensions = array<i32: 1>} : vector<8x128xi32>
    %13 = vector.broadcast %8 : i32 to vector<8x128xi32>
    %14 = arith.cmpi slt, %12, %13 : vector<8x128xi32>
    %cst = arith.constant 0.000000e+00 : f32
    %15 = vector.broadcast %cst : f32 to vector<8x128xf32>
    %16 = arith.select %14, %3, %15 : vector<8x128xi1>, vector<8x128xf32>
    %cst_5 = arith.constant dense<0.000000e+00> : vector<8xf32>
    %17 = vector.multi_reduction <add>, %16, %cst_5 [1] : vector<8x128xf32> to vector<8xf32>
    %18 = vector.shape_cast %17 : vector<8xf32> to vector<8x1xf32>
    %19 = vector.broadcast %10 : f32 to vector<8x1xf32>
    %20 = arith.divf %18, %19 : vector<8x1xf32>
    %21 = vector.broadcast %20 : vector<8x1xf32> to vector<8x128xf32>
    %22 = arith.subf %3, %21 : vector<8x128xf32>
    %cst_6 = arith.constant 0.000000e+00 : f32
    %23 = vector.broadcast %cst_6 : f32 to vector<8x128xf32>
    %24 = arith.select %14, %22, %23 : vector<8x128xi1>, vector<8x128xf32>
    %25 = arith.mulf %24, %24 : vector<8x128xf32>
    %cst_7 = arith.constant dense<0.000000e+00> : vector<8xf32>
    %26 = vector.multi_reduction <add>, %25, %cst_7 [1] : vector<8x128xf32> to vector<8xf32>
    %27 = vector.shape_cast %26 : vector<8xf32> to vector<8x1xf32>
    %c0_8 = arith.constant 0 : index
    %c0_9 = arith.constant 0 : index
    %28 = vector.load %arg4[%c0_8, %c0_9] : memref<8x1xf32, #tpu.memory_space<vmem>>, vector<8x1xf32>
    %c0_10 = arith.constant 0 : index
    %c0_11 = arith.constant 0 : index
    %29 = vector.load %arg5[%c0_10, %c0_11] : memref<8x1xf32, #tpu.memory_space<vmem>>, vector<8x1xf32>
    %30 = arith.subf %20, %28 : vector<8x1xf32>
    %31 = arith.divf %10, %11 : f32
    %32 = vector.broadcast %31 : f32 to vector<8x1xf32>
    %33 = arith.mulf %30, %32 : vector<8x1xf32>
    %34 = arith.addf %28, %33 : vector<8x1xf32>
    %c0_12 = arith.constant 0 : index
    %c0_13 = arith.constant 0 : index
    %35 = vector.load %arg4[%c0_12, %c0_13] : memref<8x1xf32, #tpu.memory_space<vmem>>, vector<8x1xf32>
    tpu.vector_store %arg4[%c0_12, %c0_13], %34 {strides = array<i32>} : memref<8x1xf32, #tpu.memory_space<vmem>>, vector<8x1xf32>,
    %36 = arith.addf %29, %27 : vector<8x1xf32>
    %37 = arith.mulf %30, %30 : vector<8x1xf32>
    %38 = arith.mulf %9, %10 : f32
    %39 = arith.divf %38, %11 : f32
    %40 = vector.broadcast %39 : f32 to vector<8x1xf32>
    %41 = arith.mulf %37, %40 : vector<8x1xf32>
    %42 = arith.addf %36, %41 : vector<8x1xf32>
    %c0_14 = arith.constant 0 : index
    %c0_15 = arith.constant 0 : index
    %43 = vector.load %arg5[%c0_14, %c0_15] : memref<8x1xf32, #tpu.memory_space<vmem>>, vector<8x1xf32>
    tpu.vector_store %arg5[%c0_14, %c0_15], %42 {strides = array<i32>} : memref<8x1xf32, #tpu.memory_space<vmem>>, vector<8x1xf32>,
    %c0_i32_16 = arith.constant 0 : i32
    %44 = arith.cmpi eq, %arg1, %c0_i32_16 : i32
    %45 = arith.extui %44 : i1 to i32
    %c0_i32_17 = arith.constant 0 : i32
    %46 = arith.cmpi ne, %45, %c0_i32_17 : i32
    scf.if %46 {
      %c0_18 = arith.constant 0 : index
      %c0_19 = arith.constant 0 : index
      %47 = vector.load %arg5[%c0_18, %c0_19] : memref<8x1xf32, #tpu.memory_space<vmem>>, vector<8x1xf32>
      %cst_20 = arith.constant 3.100000e+01 : f32
      %48 = vector.broadcast %cst_20 : f32 to vector<8x1xf32>
      %49 = arith.divf %47, %48 : vector<8x1xf32>
      %c0_21 = arith.constant 0 : index
      %c0_22 = arith.constant 0 : index
      %50 = vector.load %arg3[%c0_21, %c0_22] : memref<8x1xf32, #tpu.memory_space<vmem>>, vector<8x1xf32>
      tpu.vector_store %arg3[%c0_21, %c0_22], %49 {strides = array<i32>} : memref<8x1xf32, #tpu.memory_space<vmem>>, vector<8x1xf32>,
    } else {
    }
    return
  }
  func.func @transform_0(%arg0: i32, %arg1: i32) -> (i32, i32) {
    %c0_i32 = arith.constant 0 : i32
    return %arg0, %arg1 : i32, i32
  }
  func.func @transform_1(%arg0: i32, %arg1: i32) -> (i32, i32) {
    %c0_i32 = arith.constant 0 : i32
    %c0_i32_0 = arith.constant 0 : i32
    return %arg0, %c0_i32 : i32, i32
  }
}

</mosaic_0001>

<llo_original>
// kernel: tpu_custom_call.1
$region0: #{tpu_custom_call.1}
  #allocation0 [shape = 'u32[]', space=smem, size = 0x4, offset = 0x4, fixed_abs, tag = 'smem constant byte address 0x4 - core index']
  #allocation1 [shape = 'u32[144,128]{1,0:T(1,128)}', space=vmem, size = 0x12000, scoped, tag = 'internal scratch']
  #allocation2 [shape = 'f32[8,1]{1,0:T(8,128)}', space=vmem, size = 0x1000, scoped, tag = 'scratch operand']
  #allocation3 [shape = 'f32[8,1]{1,0:T(8,128)}', space=vmem, size = 0x1000, scoped, tag = 'scratch operand']
  %s0 = inlined_call_operand.hbm [shape: f32[8,128], index: 0, kind: input, shape index: {}]
  %s1 = inlined_call_operand.vmem [shape: f32[8,1], index: 1, kind: output, shape index: {}]
  %s2 = sld [smem:[#allocation0]]
  $region26: #{tpu_custom_call.1} parent=0
    _
  %s4 = ssub.s32 1, %s2
  %s5 = scalar_select 0, %s4, %s2
  $region1: #{tpu_custom_call.1} parent=0
    #allocation4 [shape = 'u8[4096]{0}', space=vmem, size = 0x1000, scoped, tag = 'input window, operand 0, single buffered']
    #allocation5 [shape = 's32[1]{0}', space=sflag, size = 0x4, scoped, tag = 'scoped memory for tpu_custom_call.1']
    %6 = vsyncpa [#allocation5], 0
    // Predicated region
    $region2: #{tpu_custom_call.1} parent=1 // pred_check
      _
    $region3: #{tpu_custom_call.1} parent=1 // pred_check_branch
      %8 = sbr.rel (0) target = $region5
    $region4: #{tpu_custom_call.1} parent=1 // pred_region
      %s10 = ssub.s32 128, 128
      %11 = vsyncadd [#allocation5], %s10
      %s13 = sshll.u32 [#allocation4], 4
      %s14 = int_to_ptr.vmem [resolvable:$true] %s13
      %16 = dma.hbm_to_vmem [thread:$0]  %s0, 128, %s14, [#allocation5]
    $region5: #{tpu_custom_call.1} parent=1 // pred_fallthru
      _
    // Predicated region
    $region6: #{tpu_custom_call.1} parent=1 // pred_check
      _
    $region7: #{tpu_custom_call.1} parent=1 // pred_check_branch
      %18 = sbr.rel (0) target = $region9
    $region8: #{tpu_custom_call.1} parent=1 // pred_region
      %19 = dma.done [#allocation5], 128
    $region9: #{tpu_custom_call.1} parent=1 // pred_fallthru
      _
    %p20 = scmp.eq.s32.totalorder 0, 0
    // Predicated region
    $region10: #{tpu_custom_call.1} parent=1 // pred_check
      %p21 = pneg %p20
    $region11: #{tpu_custom_call.1} parent=1 // pred_check_branch
      %23 = sbr.rel (%p21) target = $region13
    $region12: #{tpu_custom_call.1} parent=1 // pred_region
      %vm24 = vcmask 7168
      %25 = vst.msk [vmem:[#allocation2] sm:$0xff] %vm24, 0.0
      %26 = vst.msk [vmem:[#allocation3] sm:$0xff] %vm24, 0.0
    $region13: #{tpu_custom_call.1} parent=1 // pred_fallthru
      _
    %v27 = vld [vmem:[#allocation4] sm:$0xff]
    %s28 = smul.u32 0, 128
    %p29 = scmp.lt.s32.totalorder %s28, 32
    %s30 = scalar_select %p29, %s28, 32
    %s31 = ssub.s32 32, %s28
    %p32 = scmp.lt.s32.totalorder %s31, 128
    %s33 = scalar_select %p32, %s31, 128
    %s34 = scvt.s32.f32 %s30
    %s35 = scvt.s32.f32 %s33
    %s36 = sadd.f32 %s34, %s35
    %v37 = vlaneseq
    %v38 = vand.u32 %v37, 127
    %v39 = vstv %s33
    %vm40 = vcmp.lt.s32.totalorder %v38, %v39
    %v41 = vsel %vm40, %v27, 0.0
    %42 = vadd.xlane.f32.xlu0 %v41
    %v43 = vpop.xlane.xlu0 %42
    %v44 = vstv %s35
    %v45 = vrcp.pop %v44
    %v46 = vmul.f32 %v43, %v45
    %v47 = vsub.f32 %v27, %v46
    %v48 = vsel %vm40, %v47, 0.0
    %v49 = vmul.f32 %v48, %v48
    %50 = vadd.xlane.f32.xlu0 %v49
    %v51 = vpop.xlane.xlu0 %50
    %v52 = vld [vmem:[#allocation2] sm:$0xff]
    %v53 = vld [vmem:[#allocation3] sm:$0xff]
    %v54 = vsub.f32 %v46, %v52
    %v55 = vstv %s36
    %v56 = vrcp.pop %v55
    %s57 = vtos %v56
    %s58 = smul.f32 %s35, %s57
    %v59 = vstv %s58
    %v60 = vmul.f32 %v54, %v59
    %v61 = vadd.f32 %v52, %v60
    %vm62 = vcmask 7168
    %63 = vst.msk [vmem:[#allocation2] sm:$0xff] %vm62, %v61
    %v64 = vadd.f32 %v53, %v51
    %v65 = vmul.f32 %v54, %v54
    %s66 = smul.f32 %s34, %s35
    %v67 = vstv %s36
    %v68 = vrcp.pop %v67
    %s69 = vtos %v68
    %s70 = smul.f32 %s66, %s69
    %v71 = vstv %s70
    %v72 = vmul.f32 %v65, %v71
    %v73 = vadd.f32 %v64, %v72
    %74 = vst.msk [vmem:[#allocation3] sm:$0xff] %vm62, %v73
    // Predicated region
    $region14: #{tpu_custom_call.1} parent=1 // pred_check
      %p75 = pneg %p20
    $region15: #{tpu_custom_call.1} parent=1 // pred_check_branch
      %77 = sbr.rel (%p75) target = $region17
    $region16: #{tpu_custom_call.1} parent=1 // pred_region
      %v78 = vld [vmem:[#allocation3] sm:$0xff]
      %v79 = vrcp.pop 31.0
      %v80 = vmul.f32 %v78, %v79
      %81 = vst.msk [vmem:[%s1] sm:$0xff] %vm62, %v80
    $region17: #{tpu_custom_call.1} parent=1 // pred_fallthru
      _
    // Predicated region
    $region18: #{tpu_custom_call.1} parent=1 // pred_check
      _
    $region19: #{tpu_custom_call.1} parent=1 // pred_check_branch
      %83 = sbr.rel (0) target = $region21
    $region20: #{tpu_custom_call.1} parent=1 // pred_region
      _
    $region21: #{tpu_custom_call.1} parent=1 // pred_fallthru
      _
    // Predicated region
    $region22: #{tpu_custom_call.1} parent=1 // pred_check
      _
    $region23: #{tpu_custom_call.1} parent=1 // pred_check_branch
      %85 = sbr.rel (0) target = $region25
    $region24: #{tpu_custom_call.1} parent=1 // pred_region
      _
    $region25: #{tpu_custom_call.1} parent=1 // pred_fallthru
      _
    %86 = vsyncpa [#allocation5], 1

</llo_original>
